<compile_context>
chip_gen: v7x
topology: tpu7x:2x2x1
jax: 0.10.0
libtpu: 0.0.40
codegen_flags: <defaults>
</compile_context>

<pallas_src>
import functools
import math

import jax
import jax.numpy as jnp
from jax.experimental import pallas as pl
from jax.experimental.pallas import tpu as pltpu

_EPS = 1e-5
_LANES = 128


def _round_up(v, m):
    return ((v + m - 1) // m) * m


def _scoped_vmem_limit_bytes():
    """Scoped-VMEM budget: half the physical per-core VMEM, capped at 64 MiB.
    v5e/v6e (128 MiB physical) -> 64 MiB; v7x (64 MiB physical) -> 32 MiB."""
    cap = 64 * 1024 * 1024  # conservative default (v7x-sized) if query fails
    try:
        info = pltpu.get_tpu_info()
        v = getattr(info, "vmem_capacity_bytes", None)
        if isinstance(v, int) and v > 0:
            cap = v
    except Exception:
        pass
    return min(cap // 2, 64 * 1024 * 1024)


def _pick_row_tile(total_rows, lanes, itemsize, vmem_limit):
    """Row tile (multiple of 8): as large as the VMEM budget allows, but capped
    so the grid still has ~8 steps (megacore sharding + in/out DMA overlap)."""
    lane_pad = _round_up(max(lanes, _LANES), _LANES)
    # Per block-row VMEM: in + out double-buffered at the REAL itemsize, plus
    # ~4 block-sized f32 temporaries live inside the kernel body.
    per_row_bytes = lane_pad * (4 * itemsize + 4 * 4)
    budget_tile = max(8, ((vmem_limit * 3 // 4) // per_row_bytes) // 8 * 8)
    eight_step_tile = _round_up(pl.cdiv(total_rows, 8), 8)
    tile = max(8, min(budget_tile, eight_step_tile, _round_up(total_rows, 8)))
    grid = pl.cdiv(total_rows, tile)          # ragged last block, never drops rows
    return tile, grid


def _rowwise_ln_kernel(x_ref, w_ref, b_ref, o_ref, *, eps):
    """LayerNorm over the last axis; block = (tile_rows, C), C on lanes."""
    x = x_ref[...].astype(jnp.float32)        # (tile, C)
    inv_c = jnp.float32(1.0 / x.shape[-1])
    mu = jnp.sum(x, axis=-1, keepdims=True) * inv_c
    d = x - mu
    var = jnp.sum(d * d, axis=-1, keepdims=True) * inv_c
    y = d * jax.lax.rsqrt(var + eps)
    w = w_ref[...].astype(jnp.float32)
    b = b_ref[...].astype(jnp.float32)
    o_ref[...] = (y * w + b).astype(o_ref.dtype)


def _grouped_ln_kernel(x_ref, w_ref, b_ref, o_ref, *, c, eps):
    """LayerNorm where each block row packs 128//c independent rows along the
    lane axis (lane-dense for small c).  Per c-lane-segment stats via an
    XOR-butterfly all-reduce built from pltpu.roll on the XLU slot."""
    x = x_ref[...].astype(jnp.float32)        # (tile, 128)
    lanes = x.shape[-1]
    lane = jax.lax.broadcasted_iota(jnp.int32, (1, lanes), 1)

    # One-time roll-convention probe (single tiny (1,128) roll): all-True if
    # roll(v, s)[i] == v[(i + s) % lanes], all-False otherwise.  Each step's
    # partner-direction mask is then a compile-time bit test of the lane iota
    # (no per-step iota roll / compare), correct under either convention.
    fwd_fetch = pltpu.roll(lane, 1, axis=1) == ((lane + 1) & (lanes - 1))

    def seg_allreduce(v):
        out = v
        k, step = 0, 1
        while step < c:
            fwd = pltpu.roll(out, step, axis=1)
            bwd = pltpu.roll(out, lanes - step, axis=1)
            partner_ahead = ((lane >> k) & 1) == 0    # XOR partner at lane+step
            use_fwd = partner_ahead == fwd_fetch
            out = out + jnp.where(use_fwd, fwd, bwd)
            k += 1
            step *= 2
        return out

    inv_c = jnp.float32(1.0 / c)
    mu = seg_allreduce(x) * inv_c
    d = x - mu
    var = seg_allreduce(d * d) * inv_c        # two-pass: torch var(unbiased=False)
    y = d * jax.lax.rsqrt(var + eps)
    w = w_ref[...].astype(jnp.float32)
    b = b_ref[...].astype(jnp.float32)
    o_ref[...] = (y * w + b).astype(o_ref.dtype)
    # TODO(synk): if a bundle dump still shows this XLU-bound for c>=16, move
    # the segmented sums to an MXU block-diagonal one-hot matmul.


def withbias_layernorm(x, weight, bias, *, eps=_EPS):
    """(x - mean) / sqrt(var + eps) * weight + bias over the last axis of x."""
    orig_shape = x.shape
    c = orig_shape[-1]
    rows = math.prod(orig_shape[:-1]) if len(orig_shape) > 1 else 1
    itemsize = jnp.dtype(x.dtype).itemsize
    vmem_limit = _scoped_vmem_limit_bytes()

    grouped = (c < _LANES) and (_LANES % c == 0)
    pad_rows = 0
    if grouped:
        # Pack g rows per block row so the lane axis is fully used.
        g = _LANES // c
        lanes = _LANES
        x2 = x.reshape(rows, c)
        pad_rows = (-rows) % g
        if pad_rows:
            # TODO(synk): rows % g != 0 costs one extra HBM pass (pad + slice);
            # a tiny tail kernel would avoid it if this case ever matters.
            x2 = jnp.pad(x2, ((0, pad_rows), (0, 0)))
        total_rows = (rows + pad_rows) // g
        x_in = x2.reshape(total_rows, lanes)   # contiguous bitcast reshape
        w_in = jnp.tile(weight.reshape(1, c), (1, g))   # replicate once, host side
        b_in = jnp.tile(bias.reshape(1, c), (1, g))
        kernel = functools.partial(_grouped_ln_kernel, c=c, eps=eps)
    else:
        # TODO(synk): C that is neither a divisor of 128 nor lane-dense (e.g. 48)
        # keeps lanes partially used; a general path would need an lcm(C,128)
        # packing with a segmented one-hot MXU reduction.
        lanes = c
        total_rows = rows
        x_in = x.reshape(rows, c)
        w_in = weight.reshape(1, c)
        b_in = bias.reshape(1, c)
        kernel = functools.partial(_rowwise_ln_kernel, eps=eps)

    tile, grid = _pick_row_tile(total_rows, lanes, itemsize, vmem_limit)

    out = pl.pallas_call(
        kernel,
        out_shape=jax.ShapeDtypeStruct((total_rows, lanes), x.dtype),
        grid_spec=pltpu.PrefetchScalarGridSpec(
            num_scalar_prefetch=0,
            grid=(grid,),
            in_specs=[
                pl.BlockSpec((tile, lanes), lambda i: (i, 0)),
                pl.BlockSpec((1, lanes), lambda i: (0, 0)),
                pl.BlockSpec((1, lanes), lambda i: (0, 0)),
            ],
            out_specs=pl.BlockSpec((tile, lanes), lambda i: (i, 0)),
        ),
        compiler_params=pltpu.CompilerParams(
            dimension_semantics=("parallel",),
            vmem_limit_bytes=vmem_limit,
        ),
    )(x_in, w_in, b_in)

    if grouped:
        out = out.reshape(rows + pad_rows, c)
        if pad_rows:
            out = out[:rows]
    return out.reshape(orig_shape)


def _reference(x, w, b, eps=_EPS):
    mu = jnp.mean(x, axis=-1, keepdims=True)
    var = jnp.mean((x - mu) ** 2, axis=-1, keepdims=True)
    return (x - mu) / jnp.sqrt(var + eps) * w + b


if __name__ == "__main__":
    key = jax.random.PRNGKey(0)
    k0, k1, k2, k3 = jax.random.split(key, 4)

    # MDGTNet-style demo: NCHW feature map -> to_3d -> (B, H*W, C), C = 4.
    B, C, H, W = 2, 4, 16, 16
    x_nchw = jax.random.normal(k0, (B, C, H, W), dtype=jnp.float32)
    x = jnp.transpose(x_nchw, (0, 2, 3, 1)).reshape(B, H * W, C)
    weight = jnp.ones((C,), jnp.float32) + 0.1 * jnp.arange(C, dtype=jnp.float32)
    bias = 0.01 * jnp.arange(C, dtype=jnp.float32)

    out = jax.block_until_ready(withbias_layernorm(x, weight, bias))
    ref = _reference(x, weight, bias)
    assert out.shape == x.shape and out.dtype == x.dtype
    assert jnp.allclose(out, ref, atol=1e-5, rtol=1e-5)

    # Fallback row-wise path (C not a divisor of 128) with a ragged grid.
    c2 = 48
    x2 = jax.random.normal(k1, (3, 50, c2), dtype=jnp.float32)
    w2 = 1.0 + 0.01 * jnp.arange(c2, dtype=jnp.float32)
    b2 = 0.001 * jnp.arange(c2, dtype=jnp.float32)
    out2 = jax.block_until_ready(withbias_layernorm(x2, w2, b2))
    assert jnp.allclose(out2, _reference(x2, w2, b2), atol=1e-5, rtol=1e-5)

    # Grouped path, multiple grid steps, ragged last block, no host pad (C=32).
    c3 = 32
    x3 = jax.random.normal(k2, (2, 4500, c3), dtype=jnp.float32)
    w3 = 1.0 - 0.005 * jnp.arange(c3, dtype=jnp.float32)
    b3 = 0.002 * jnp.arange(c3, dtype=jnp.float32)
    out3 = jax.block_until_ready(withbias_layernorm(x3, w3, b3))
    assert jnp.allclose(out3, _reference(x3, w3, b3), atol=1e-5, rtol=1e-5)

    # Grouped path where rows % g != 0 (small pad-to-multiple-of-g path), C=4.
    x4 = jax.random.normal(k3, (4, 129, C), dtype=jnp.float32)
    out4 = jax.block_until_ready(withbias_layernorm(x4, weight, bias))
    assert jnp.allclose(out4, _reference(x4, weight, bias), atol=1e-5, rtol=1e-5)

    print("KERNEL_OK")
</pallas_src>

<mosaic_0001>
module attributes {stable_mosaic.version = 11 : i64} {
  func.func @_grouped_ln_kernel(%arg0: i32, %arg1: memref<8x128xf32, #tpu.memory_space<vmem>>, %arg2: memref<1x128xf32, #tpu.memory_space<vmem>>, %arg3: memref<1x128xf32, #tpu.memory_space<vmem>>, %arg4: memref<8x128xf32, #tpu.memory_space<vmem>>) attributes {dimension_semantics = [#tpu.dimension_semantics<parallel>], iteration_bounds = array<i64: 2>, scalar_prefetch = 0 : i64, scratch_operands = 0 : i64, tpu.core_type = #tpu.core_type<tc>, window_params = [{transform_indices = @transform_0, window_bounds = array<i64: 8, 128>}, {pipeline_mode = #tpu.pipeline_mode<synchronous>, transform_indices = @transform_1, window_bounds = array<i64: 1, 128>}, {pipeline_mode = #tpu.pipeline_mode<synchronous>, transform_indices = @transform_2, window_bounds = array<i64: 1, 128>}, {transform_indices = @transform_3, window_bounds = array<i64: 8, 128>}]} {
    %c0 = arith.constant 0 : index
    %c0_0 = arith.constant 0 : index
    %0 = vector.load %arg1[%c0, %c0_0] : memref<8x128xf32, #tpu.memory_space<vmem>>, vector<8x128xf32>
    %1 = tpu.iota {dimensions = array<i32: 1>} : vector<1x128xi32>
    %c1_i32 = arith.constant 1 : i32
    %2 = tpu.dynamic_rotate %1 by %c1_i32 dim 1 : vector<1x128xi32>, i32 -> vector<1x128xi32>
    %c1_i32_1 = arith.constant 1 : i32
    %3 = vector.broadcast %c1_i32_1 : i32 to vector<1x128xi32>
    %4 = arith.addi %1, %3 : vector<1x128xi32>
    %c127_i32 = arith.constant 127 : i32
    %5 = vector.broadcast %c127_i32 : i32 to vector<1x128xi32>
    %6 = arith.andi %4, %5 : vector<1x128xi32>
    %7 = arith.cmpi eq, %2, %6 : vector<1x128xi32>
    %c1_i32_2 = arith.constant 1 : i32
    %8 = tpu.dynamic_rotate %0 by %c1_i32_2 dim 1 : vector<8x128xf32>, i32 -> vector<8x128xf32>
    %c127_i32_3 = arith.constant 127 : i32
    %9 = tpu.dynamic_rotate %0 by %c127_i32_3 dim 1 : vector<8x128xf32>, i32 -> vector<8x128xf32>
    %c0_i32 = arith.constant 0 : i32
    %10 = vector.broadcast %c0_i32 : i32 to vector<1x128xi32>
    %11 = arith.shrsi %1, %10 : vector<1x128xi32>
    %c1_i32_4 = arith.constant 1 : i32
    %12 = vector.broadcast %c1_i32_4 : i32 to vector<1x128xi32>
    %13 = arith.andi %11, %12 : vector<1x128xi32>
    %c0_i32_5 = arith.constant 0 : i32
    %14 = vector.broadcast %c0_i32_5 : i32 to vector<1x128xi32>
    %15 = arith.cmpi eq, %13, %14 : vector<1x128xi32>
    %16 = arith.xori %15, %7 : vector<1x128xi1>
    %cst = arith.constant dense<true> : vector<1x128xi1>
    %17 = arith.xori %16, %cst : vector<1x128xi1>
    %18 = vector.shape_cast %17 : vector<1x128xi1> to vector<1x128xi1>
    %19 = vector.broadcast %18 : vector<1x128xi1> to vector<8x128xi1>
    %20 = arith.select %19, %8, %9 : vector<8x128xi1>, vector<8x128xf32>
    %21 = arith.addf %0, %20 : vector<8x128xf32>
    %c2_i32 = arith.constant 2 : i32
    %22 = tpu.dynamic_rotate %21 by %c2_i32 dim 1 : vector<8x128xf32>, i32 -> vector<8x128xf32>
    %c126_i32 = arith.constant 126 : i32
    %23 = tpu.dynamic_rotate %21 by %c126_i32 dim 1 : vector<8x128xf32>, i32 -> vector<8x128xf32>
    %c1_i32_6 = arith.constant 1 : i32
    %24 = vector.broadcast %c1_i32_6 : i32 to vector<1x128xi32>
    %25 = arith.shrsi %1, %24 : vector<1x128xi32>
    %c1_i32_7 = arith.constant 1 : i32
    %26 = vector.broadcast %c1_i32_7 : i32 to vector<1x128xi32>
    %27 = arith.andi %25, %26 : vector<1x128xi32>
    %c0_i32_8 = arith.constant 0 : i32
    %28 = vector.broadcast %c0_i32_8 : i32 to vector<1x128xi32>
    %29 = arith.cmpi eq, %27, %28 : vector<1x128xi32>
    %30 = arith.xori %29, %7 : vector<1x128xi1>
    %cst_9 = arith.constant dense<true> : vector<1x128xi1>
    %31 = arith.xori %30, %cst_9 : vector<1x128xi1>
    %32 = vector.shape_cast %31 : vector<1x128xi1> to vector<1x128xi1>
    %33 = vector.broadcast %32 : vector<1x128xi1> to vector<8x128xi1>
    %34 = arith.select %33, %22, %23 : vector<8x128xi1>, vector<8x128xf32>
    %35 = arith.addf %21, %34 : vector<8x128xf32>
    %cst_10 = arith.constant 2.500000e-01 : f32
    %36 = vector.broadcast %cst_10 : f32 to vector<8x128xf32>
    %37 = arith.mulf %35, %36 : vector<8x128xf32>
    %38 = arith.subf %0, %37 : vector<8x128xf32>
    %39 = arith.mulf %38, %38 : vector<8x128xf32>
    %c1_i32_11 = arith.constant 1 : i32
    %40 = tpu.dynamic_rotate %39 by %c1_i32_11 dim 1 : vector<8x128xf32>, i32 -> vector<8x128xf32>
    %c127_i32_12 = arith.constant 127 : i32
    %41 = tpu.dynamic_rotate %39 by %c127_i32_12 dim 1 : vector<8x128xf32>, i32 -> vector<8x128xf32>
    %c0_i32_13 = arith.constant 0 : i32
    %42 = vector.broadcast %c0_i32_13 : i32 to vector<1x128xi32>
    %43 = arith.shrsi %1, %42 : vector<1x128xi32>
    %c1_i32_14 = arith.constant 1 : i32
    %44 = vector.broadcast %c1_i32_14 : i32 to vector<1x128xi32>
    %45 = arith.andi %43, %44 : vector<1x128xi32>
    %c0_i32_15 = arith.constant 0 : i32
    %46 = vector.broadcast %c0_i32_15 : i32 to vector<1x128xi32>
    %47 = arith.cmpi eq, %45, %46 : vector<1x128xi32>
    %48 = arith.xori %47, %7 : vector<1x128xi1>
    %cst_16 = arith.constant dense<true> : vector<1x128xi1>
    %49 = arith.xori %48, %cst_16 : vector<1x128xi1>
    %50 = vector.shape_cast %49 : vector<1x128xi1> to vector<1x128xi1>
    %51 = vector.broadcast %50 : vector<1x128xi1> to vector<8x128xi1>
    %52 = arith.select %51, %40, %41 : vector<8x128xi1>, vector<8x128xf32>
    %53 = arith.addf %39, %52 : vector<8x128xf32>
    %c2_i32_17 = arith.constant 2 : i32
    %54 = tpu.dynamic_rotate %53 by %c2_i32_17 dim 1 : vector<8x128xf32>, i32 -> vector<8x128xf32>
    %c126_i32_18 = arith.constant 126 : i32
    %55 = tpu.dynamic_rotate %53 by %c126_i32_18 dim 1 : vector<8x128xf32>, i32 -> vector<8x128xf32>
    %c1_i32_19 = arith.constant 1 : i32
    %56 = vector.broadcast %c1_i32_19 : i32 to vector<1x128xi32>
    %57 = arith.shrsi %1, %56 : vector<1x128xi32>
    %c1_i32_20 = arith.constant 1 : i32
    %58 = vector.broadcast %c1_i32_20 : i32 to vector<1x128xi32>
    %59 = arith.andi %57, %58 : vector<1x128xi32>
    %c0_i32_21 = arith.constant 0 : i32
    %60 = vector.broadcast %c0_i32_21 : i32 to vector<1x128xi32>
    %61 = arith.cmpi eq, %59, %60 : vector<1x128xi32>
    %62 = arith.xori %61, %7 : vector<1x128xi1>
    %cst_22 = arith.constant dense<true> : vector<1x128xi1>
    %63 = arith.xori %62, %cst_22 : vector<1x128xi1>
    %64 = vector.shape_cast %63 : vector<1x128xi1> to vector<1x128xi1>
    %65 = vector.broadcast %64 : vector<1x128xi1> to vector<8x128xi1>
    %66 = arith.select %65, %54, %55 : vector<8x128xi1>, vector<8x128xf32>
    %67 = arith.addf %53, %66 : vector<8x128xf32>
    %cst_23 = arith.constant 2.500000e-01 : f32
    %68 = vector.broadcast %cst_23 : f32 to vector<8x128xf32>
    %69 = arith.mulf %67, %68 : vector<8x128xf32>
    %cst_24 = arith.constant 9.99999974E-6 : f32
    %70 = vector.broadcast %cst_24 : f32 to vector<8x128xf32>
    %71 = arith.addf %69, %70 : vector<8x128xf32>
    %72 = math.rsqrt %71 : vector<8x128xf32>
    %73 = arith.mulf %38, %72 : vector<8x128xf32>
    %c0_25 = arith.constant 0 : index
    %c0_26 = arith.constant 0 : index
    %74 = vector.load %arg2[%c0_25, %c0_26] : memref<1x128xf32, #tpu.memory_space<vmem>>, vector<1x128xf32>
    %c0_27 = arith.constant 0 : index
    %c0_28 = arith.constant 0 : index
    %75 = vector.load %arg3[%c0_27, %c0_28] : memref<1x128xf32, #tpu.memory_space<vmem>>, vector<1x128xf32>
    %76 = vector.broadcast %74 : vector<1x128xf32> to vector<8x128xf32>
    %77 = arith.mulf %73, %76 : vector<8x128xf32>
    %78 = vector.broadcast %75 : vector<1x128xf32> to vector<8x128xf32>
    %79 = arith.addf %77, %78 : vector<8x128xf32>
    %c0_29 = arith.constant 0 : index
    %c0_30 = arith.constant 0 : index
    %80 = vector.load %arg4[%c0_29, %c0_30] : memref<8x128xf32, #tpu.memory_space<vmem>>, vector<8x128xf32>
    tpu.vector_store %arg4[%c0_29, %c0_30], %79 {strides = array<i32>} : memref<8x128xf32, #tpu.memory_space<vmem>>, vector<8x128xf32>,
    return
  }
  func.func @transform_0(%arg0: i32) -> (i32, i32) {
    %c0_i32 = arith.constant 0 : i32
    %c0_i32_0 = arith.constant 0 : i32
    return %arg0, %c0_i32 : i32, i32
  }
  func.func @transform_1(%arg0: i32) -> (i32, i32) {
    %c0_i32 = arith.constant 0 : i32
    %c0_i32_0 = arith.constant 0 : i32
    %c0_i32_1 = arith.constant 0 : i32
    return %c0_i32, %c0_i32_0 : i32, i32
  }
  func.func @transform_2(%arg0: i32) -> (i32, i32) {
    %c0_i32 = arith.constant 0 : i32
    %c0_i32_0 = arith.constant 0 : i32
    %c0_i32_1 = arith.constant 0 : i32
    return %c0_i32, %c0_i32_0 : i32, i32
  }
  func.func @transform_3(%arg0: i32) -> (i32, i32) {
    %c0_i32 = arith.constant 0 : i32
    %c0_i32_0 = arith.constant 0 : i32
    return %arg0, %c0_i32 : i32, i32
  }
}

</mosaic_0001>

<llo_original>
// kernel: tpu_custom_call.1
$region0: #{tpu_custom_call.1}
  #allocation0 [shape = 'u32[]', space=smem, size = 0x4, offset = 0x4, fixed_abs, tag = 'smem constant byte address 0x4 - core index']
  #allocation1 [shape = 'u32[144,128]{1,0:T(1,128)}', space=vmem, size = 0x12000, scoped, tag = 'internal scratch']
  %s0 = inlined_call_operand.hbm [shape: f32[16,128], index: 0, kind: input, shape index: {}]
  %s1 = inlined_call_operand.vmem [shape: f32[1,128], index: 1, kind: input, shape index: {}]
  %s2 = inlined_call_operand.vmem [shape: f32[1,128], index: 2, kind: input, shape index: {}]
  %s3 = inlined_call_operand.hbm [shape: f32[16,128], index: 3, kind: output, shape index: {}]
  %s4 = sld [smem:[#allocation0]]
  $region49: #{tpu_custom_call.1} parent=0
    _
  %s6 = ssub.s32 1, %s4
  %s7 = scalar_select 0, %s6, %s4
  $region1: #{tpu_custom_call.1} parent=0
    #allocation2 [shape = 'u8[8192]{0}', space=vmem, size = 0x2000, scoped, tag = 'input window, operand 0']
    #allocation3 [shape = 's32[2]{0}', space=sflag, size = 0x8, scoped, tag = 'scoped memory for tpu_custom_call.1']
    #allocation4 [shape = 's32[2]{0}', space=sflag, size = 0x8, scoped, tag = 'scoped memory for tpu_custom_call.1']
    #allocation5 [shape = 'u8[8192]{0}', space=vmem, size = 0x2000, scoped, tag = 'output window, operand 0']
    %8 = vsyncpa [#allocation3], 0
    %s9 = scalar_lea.sflag [#allocation3], 1
    %10 = vsyncpa %s9, 0
    %11 = vsyncpa [#allocation4], 0
    %s12 = scalar_lea.sflag [#allocation4], 1
    %13 = vsyncpa %s12, 0
    loop: start=0, step=1, limit=4
    $region2: #{tpu_custom_call.1} parent=1 // loop_pre_header
      _
    $region3: #{tpu_custom_call.1} parent=1 // loop_header
      %s15 = sphi 0, %s19
      %p16 = scmp.ge.s32.totalorder %s15, 4
      %s25 = sphi 0, %s27
      %s28 = sphi 0, %s25
      %s29 = sphi 0, %s28
      %s45 = sphi 0, %s29
      %s49 = sphi 0, %s49
      %s51 = sphi 0, %s49
      %s52 = sphi 0, %s51
      %s66 = sphi 0, %s52
      %s70 = sphi 0, %s70
      %s72 = sphi 0, %s70
      %s73 = sphi 0, %s72
      %s87 = sphi 0, %s73
      %s93 = sphi 0, %s95
      %s96 = sphi 0, %s93
      %s97 = sphi 0, %s96
      %s113 = sphi 0, %s97
    $region4: #{tpu_custom_call.1} parent=1 // loop_header_branch
      %18 = sbr.rel (%p16) target = $region8
    $region5: #{tpu_custom_call.1} parent=1 // loop_body
      %s20 = ssub.s32 %s15, 1
      %s21 = ssub.s32 %s15, 2
      %s22 = sadd.s32 %s15, 1
      %s23 = ssub.s32 %s15, %s22
      %p24 = scmp.eq.s32.totalorder %s23, 0
      %s26 = sadd.s32 %s25, 1
      %s27 = scalar_select %p24, %s25, %s26
      %p30 = pneg %p24
      %p31 = scmp.eq.s32.totalorder %s15, 1
      %p32 = por %p30, %p31
      %p33 = scmp.ne.s32.totalorder %s25, %s28
      %p34 = scmp.eq.s32.totalorder %s15, 0
      %p35 = por %p33, %p34
      %p36 = scmp.ne.s32.totalorder %s25, %s28
      %p37 = scmp.eq.s32.totalorder %s20, 1
      %p38 = por %p36, %p37
      %p39 = scmp.ne.s32.totalorder %s28, %s29
      %p40 = scmp.eq.s32.totalorder %s20, 0
      %p41 = por %p39, %p40
      %p42 = scmp.ne.s32.totalorder %s28, %s29
      %p43 = scmp.eq.s32.totalorder %s21, 1
      %p44 = por %p42, %p43
      %p46 = scmp.ne.s32.totalorder %s29, %s45
      %p47 = scmp.eq.s32.totalorder %s21, 0
      %p48 = por %p46, %p47
      %s50 = sadd.s32 %s49, 1
      %p53 = scmp.eq.s32.totalorder %s15, 1
      %p54 = scmp.ne.s32.totalorder %s49, %s51
      %p55 = scmp.eq.s32.totalorder %s15, 0
      %p56 = por %p54, %p55
      %p57 = scmp.ne.s32.totalorder %s49, %s51
      %p58 = scmp.eq.s32.totalorder %s20, 1
      %p59 = por %p57, %p58
      %p60 = scmp.ne.s32.totalorder %s51, %s52
      %p61 = scmp.eq.s32.totalorder %s20, 0
      %p62 = por %p60, %p61
      %p63 = scmp.ne.s32.totalorder %s51, %s52
      %p64 = scmp.eq.s32.totalorder %s21, 1
      %p65 = por %p63, %p64
      %p67 = scmp.ne.s32.totalorder %s52, %s66
      %p68 = scmp.eq.s32.totalorder %s21, 0
      %p69 = por %p67, %p68
      %s71 = sadd.s32 %s70, 1
      %p74 = scmp.eq.s32.totalorder %s15, 1
      %p75 = scmp.ne.s32.totalorder %s70, %s72
      %p76 = scmp.eq.s32.totalorder %s15, 0
      %p77 = por %p75, %p76
      %p78 = scmp.ne.s32.totalorder %s70, %s72
      %p79 = scmp.eq.s32.totalorder %s20, 1
      %p80 = por %p78, %p79
      %p81 = scmp.ne.s32.totalorder %s72, %s73
      %p82 = scmp.eq.s32.totalorder %s20, 0
      %p83 = por %p81, %p82
      %p84 = scmp.ne.s32.totalorder %s72, %s73
      %p85 = scmp.eq.s32.totalorder %s21, 1
      %p86 = por %p84, %p85
      %p88 = scmp.ne.s32.totalorder %s73, %s87
      %p89 = scmp.eq.s32.totalorder %s21, 0
      %p90 = por %p88, %p89
      %s91 = ssub.s32 %s15, %s22
      %p92 = scmp.eq.s32.totalorder %s91, 0
      %s94 = sadd.s32 %s93, 1
      %s95 = scalar_select %p92, %s93, %s94
      %p98 = pneg %p92
      %p99 = scmp.eq.s32.totalorder %s15, 1
      %p100 = por %p98, %p99
      %p101 = scmp.ne.s32.totalorder %s93, %s96
      %p102 = scmp.eq.s32.totalorder %s15, 0
      %p103 = por %p101, %p102
      %p104 = scmp.ne.s32.totalorder %s93, %s96
      %p105 = scmp.eq.s32.totalorder %s20, 1
      %p106 = por %p104, %p105
      %p107 = scmp.ne.s32.totalorder %s96, %s97
      %p108 = scmp.eq.s32.totalorder %s20, 0
      %p109 = por %p107, %p108
      %p110 = scmp.ne.s32.totalorder %s96, %s97
      %p111 = scmp.eq.s32.totalorder %s21, 1
      %p112 = por %p110, %p111
      %p114 = scmp.ne.s32.totalorder %s97, %s113
      %p115 = scmp.eq.s32.totalorder %s21, 0
      %p116 = por %p114, %p115
      %p117 = scmp.le.s32.totalorder 1, %s15
      %p118 = scmp.lt.s32.totalorder %s15, 3
      %p119 = pnand %p117, %p118
      %p120 = pneg %p119
      // Predicated region
      $region9: #{tpu_custom_call.1} parent=5 // pred_check
        _
      $region10: #{tpu_custom_call.1} parent=5 // pred_check_branch
        %122 = sbr.rel (%p119) target = $region12
      $region11: #{tpu_custom_call.1} parent=5 // pred_region
        %s123 = ssub.s32 %s15, 1
        // Predicated region
        $region13: #{tpu_custom_call.1} parent=11 // pred_check
          %p124 = pneg %p62
        $region14: #{tpu_custom_call.1} parent=11 // pred_check_branch
          %126 = sbr.rel (%p124) target = $region16
        $region15: #{tpu_custom_call.1} parent=11 // pred_region
          _
        $region16: #{tpu_custom_call.1} parent=11 // pred_fallthru
          _
        // Predicated region
        $region17: #{tpu_custom_call.1} parent=11 // pred_check
          %p127 = pneg %p83
        $region18: #{tpu_custom_call.1} parent=11 // pred_check_branch
          %129 = sbr.rel (%p127) target = $region20
        $region19: #{tpu_custom_call.1} parent=11 // pred_region
          _
        $region20: #{tpu_custom_call.1} parent=11 // pred_fallthru
          _
      $region12: #{tpu_custom_call.1} parent=5 // pred_fallthru
        _
      %p130 = scmp.lt.s32.totalorder %s15, 2
      // Predicated region
      $region21: #{tpu_custom_call.1} parent=5 // pred_check
        %p131 = pneg %p130
      $region22: #{tpu_custom_call.1} parent=5 // pred_check_branch
        %133 = sbr.rel (%p131) target = $region24
      $region23: #{tpu_custom_call.1} parent=5 // pred_region
        // Predicated region
        $region25: #{tpu_custom_call.1} parent=23 // pred_check
          %p134 = pneg %p35
        $region26: #{tpu_custom_call.1} parent=23 // pred_check_branch
          %136 = sbr.rel (%p134) target = $region28
        $region27: #{tpu_custom_call.1} parent=23 // pred_region
          %s137 = sand.u32 %s25, 1
          %s138 = scalar_lea.sflag [#allocation3], %s137
          %s139 = sand.u32 %s25, 1
          %s140 = smul.addr %s139, 8
          %s141 = scalar_lea.vmem [#allocation2], %s140
          %s143 = ssub.s32 128, 128
          %144 = vsyncadd %s138, %s143
          %s145 = smul.addr %s15, 128
          %s146 = scalar_lea.hbm %s0, %s145
          %s148 = sshll.u32 %s141, 4
          %s149 = int_to_ptr.vmem [resolvable:$true] %s148
          %151 = dma.hbm_to_vmem [thread:$0]  %s146, 128, %s149, %s138
        $region28: #{tpu_custom_call.1} parent=23 // pred_fallthru
          _
      $region24: #{tpu_custom_call.1} parent=5 // pred_fallthru
        _
      %p152 = scmp.le.s32.totalorder 1, %s15
      %p153 = scmp.lt.s32.totalorder %s15, 3
      %p154 = pnand %p152, %p153
      %p155 = pneg %p154
      // Predicated region
      $region29: #{tpu_custom_call.1} parent=5 // pred_check
        _
      $region30: #{tpu_custom_call.1} parent=5 // pred_check_branch
        %157 = sbr.rel (%p154) target = $region32
      $region31: #{tpu_custom_call.1} parent=5 // pred_region
        %s158 = ssub.s32 %s15, 1
        %s159 = sand.u32 %s28, 1
        %s160 = scalar_lea.sflag [#allocation3], %s159
        %s161 = sand.u32 %s28, 1
        %s162 = smul.addr %s161, 8
        %s163 = scalar_lea.vmem [#allocation2], %s162
        // Predicated region
        $region33: #{tpu_custom_call.1} parent=31 // pred_check
          %p164 = pneg %p41
        $region34: #{tpu_custom_call.1} parent=31 // pred_check_branch
          %166 = sbr.rel (%p164) target = $region36
        $region35: #{tpu_custom_call.1} parent=31 // pred_region
          %167 = dma.done %s160, 128
        $region36: #{tpu_custom_call.1} parent=31 // pred_fallthru
          _
        %s168 = sand.u32 %s28, 1
        %s169 = scalar_lea.sflag [#allocation3], %s168
        %s170 = sand.u32 %s28, 1
        %s171 = smul.addr %s170, 8
        %s172 = scalar_lea.vmem [#allocation2], %s171
        %p173 = pneg %p41
        %p174 = pneg %p38
        %p175 = pneg %p62
        %p176 = pneg %p59
        %p177 = pneg %p83
        %p178 = pneg %p80
        %p179 = pneg %p109
        %p180 = pneg %p106
        %s181 = sand.u32 %s96, 1
        %s182 = scalar_lea.sflag [#allocation4], %s181
        %s183 = sand.u32 %s96, 1
        %s184 = smul.addr %s183, 8
        %s185 = scalar_lea.vmem [#allocation5], %s184
        %v186 = vld [vmem:[%s163] sm:$0xff]
        %v187 = vlaneseq
        %v188 = vand.u32 %v187, 127
        %189 = vrot.lane.b32.xlu0 %v188, 1
        %v190 = vpop.permute.xlu0 %189
        %v191 = vadd.s32 %v188, 1
        %v192 = vand.u32 %v191, 127
        %vm193 = vcmp.eq.s32.totalorder %v190, %v192
        %194 = vrot.lane.b32.xlu0 %v186, 1
        %v195 = vpop.permute.xlu0 %194
        %196 = vrot.lane.b32.xlu0 %v186, 127
        %v197 = vpop.permute.xlu0 %196
        %v198 = vand.u32 %v188, 1
        %vm199 = vcmp.eq.s32.totalorder %v198, 0
        %vm200 = vmxor %vm199, %vm193
        %vm201 = vmxor %vm200, 1
        %v202 = vsel %vm201, 1, 0
        %v203 = vlaneseq
        %v204 = vshrl.u32 %v203, 7
        %v205 = vsub.s32 0, %v204
        %v206 = vrot.slane %v202, %v205
        %vm207 = vcmp.eq.s32.totalorder %v206, 1
        %v208 = vsel %vm207, %v195, %v197
        %v209 = vadd.f32 %v186, %v208
        %210 = vrot.lane.b32.xlu0 %v209, 2
        %v211 = vpop.permute.xlu0 %210
        %212 = vrot.lane.b32.xlu0 %v209, 126
        %v213 = vpop.permute.xlu0 %212
        %v214 = vshra.s32 %v188, 1
        %v215 = vand.u32 %v214, 1
        %vm216 = vcmp.eq.s32.totalorder %v215, 0
        %vm217 = vmxor %vm216, %vm193
        %vm218 = vmxor %vm217, 1
        %v219 = vsel %vm218, 1, 0
        %v220 = vlaneseq
        %v221 = vshrl.u32 %v220, 7
        %v222 = vsub.s32 0, %v221
        %v223 = vrot.slane %v219, %v222
        %vm224 = vcmp.eq.s32.totalorder %v223, 1
        %v225 = vsel %vm224, %v211, %v213
        %v226 = vadd.f32 %v209, %v225
        %v227 = vmul.f32 %v226, 0.25
        %v228 = vsub.f32 %v186, %v227
        %v229 = vmul.f32 %v228, %v228
        %230 = vrot.lane.b32.xlu0 %v229, 1
        %v231 = vpop.permute.xlu0 %230
        %232 = vrot.lane.b32.xlu0 %v229, 127
        %v233 = vpop.permute.xlu0 %232
        %v234 = vsel %vm207, %v231, %v233
        %v235 = vadd.f32 %v229, %v234
        %236 = vrot.lane.b32.xlu0 %v235, 2
        %v237 = vpop.permute.xlu0 %236
        %238 = vrot.lane.b32.xlu0 %v235, 126
        %v239 = vpop.permute.xlu0 %238
        %v240 = vsel %vm224, %v237, %v239
        %v241 = vadd.f32 %v235, %v240
        %v242 = vmul.f32 %v241, 0.25
        %v243 = vadd.f32 %v242, 1e-05
        %v244 = vrsqrt.pop %v243
        %v245 = vmul.f32 %v228, %v244
        %v246 = vld [vmem:[%s1] sm:$0x1]
        %v247 = vld [vmem:[%s2] sm:$0x1]
        %v249 = vlaneseq
        %v250 = vshrl.u32 %v249, 7
        %v251 = vsub.s32 0, %v250
        %v252 = vrot.slane %v246, %v251
        %v254 = vmul.f32 %v245, %v252
        %v256 = vlaneseq
        %v257 = vshrl.u32 %v256, 7
        %v258 = vsub.s32 0, %v257
        %v259 = vrot.slane %v247, %v258
        %v261 = vadd.f32 %v254, %v259
        %262 = vst [vmem:[%s185] sm:$0xff] %v261
        %s263 = sand.u32 %s96, 1
        %s264 = scalar_lea.sflag [#allocation4], %s263
        %s265 = sand.u32 %s96, 1
        %s266 = smul.addr %s265, 8
        %s267 = scalar_lea.vmem [#allocation5], %s266
        // Predicated region
        $region37: #{tpu_custom_call.1} parent=31 // pred_check
          %p268 = pneg %p106
        $region38: #{tpu_custom_call.1} parent=31 // pred_check_branch
          %270 = sbr.rel (%p268) target = $region40
        $region39: #{tpu_custom_call.1} parent=31 // pred_region
          %s272 = ssub.s32 128, 128
          %273 = vsyncadd %s264, %s272
          %s274 = smul.addr %s20, 128
          %s275 = scalar_lea.hbm %s3, %s274
          %s277 = sshll.u32 %s267, 4
          %s278 = int_to_ptr.vmem [resolvable:$true] %s277
          %280 = dma.vmem_to_hbm [thread:$0]  %s278, 128, %s275, %s264
        $region40: #{tpu_custom_call.1} parent=31 // pred_fallthru
          _
      $region32: #{tpu_custom_call.1} parent=5 // pred_fallthru
        _
      %p281 = scmp.le.s32.totalorder 2, %s15
      // Predicated region
      $region41: #{tpu_custom_call.1} parent=5 // pred_check
        %p282 = pneg %p281
      $region42: #{tpu_custom_call.1} parent=5 // pred_check_branch
        %284 = sbr.rel (%p282) target = $region44
      $region43: #{tpu_custom_call.1} parent=5 // pred_region
        %s285 = ssub.s32 %s15, 2
        // Predicated region
        $region45: #{tpu_custom_call.1} parent=43 // pred_check
          %p286 = pneg %p112
        $region46: #{tpu_custom_call.1} parent=43 // pred_check_branch
          %288 = sbr.rel (%p286) target = $region48
        $region47: #{tpu_custom_call.1} parent=43 // pred_region
          %s289 = sand.u32 %s97, 1
          %s290 = scalar_lea.sflag [#allocation4], %s289
          %s291 = sand.u32 %s97, 1
          %s292 = smul.addr %s291, 8
          %s293 = scalar_lea.vmem [#allocation5], %s292
          %294 = dma.done %s290, 128
        $region48: #{tpu_custom_call.1} parent=43 // pred_fallthru
          _
      $region44: #{tpu_custom_call.1} parent=5 // pred_fallthru
        _
    $region6: #{tpu_custom_call.1} parent=1 // loop_footer
      %s19 = sadd.s32 1, %s15
    $region7: #{tpu_custom_call.1} parent=1 // loop_footer_branch
      %14 = sbr.rel target = $region3
    $region8: #{tpu_custom_call.1} parent=1 // loop_exit
      _
    %295 = vsyncpa [#allocation3], 1
    %s296 = scalar_lea.sflag [#allocation3], 1
    %297 = vsyncpa %s296, 1
    %298 = vsyncpa [#allocation4], 1
    %s299 = scalar_lea.sflag [#allocation4], 1
    %300 = vsyncpa %s299, 1

</llo_original>
